<compile_context>
chip_gen: v7x
topology: tpu7x:2x2x1
jax: 0.10.0
libtpu: 0.0.40
codegen_flags: <defaults>
</compile_context>

<pallas_src>
import functools

import jax
import jax.numpy as jnp
from jax import lax
from jax.experimental import pallas as pl
from jax.experimental.pallas import tpu as pltpu


def _effi_dws_kernel(x_ref, dww_ref, dwb_ref,
                     sew1_ref, seb1_ref, sew2_ref, seb2_ref,
                     pww_ref, pwb_ref,
                     out_ref,
                     *, H: int, W: int, C: int, residual: bool):
    # x_ref   : (Nb, H, W*C)   lane-dense input block (lane = w*C + c)
    # dww_ref : (9, H, W*C)    3x3 dw weights, tap-major; BN scale and the
    #                          H/W edge masks are already folded in.
    # dwb_ref : (1, W*C)       folded BN bias after the dw conv
    # sew1    : (W*C, M)       SE squeeze weights (pool 1/(H*W) folded in)
    # seb1    : (1, M)
    # sew2    : (M, W*C)       SE excite weights, pre-tiled over w
    # seb2    : (1, W*C)
    # pww     : (W*C, W*Co)    pointwise 1x1 conv as block-diagonal matrix,
    #                          pw BN scale folded into the columns
    # pwb     : (1, W*Co)      folded BN bias after the pw conv
    # out_ref : (Nb, H, W*Co)
    Nb = x_ref.shape[0]
    L = W * C
    Lo = out_ref.shape[2]

    x3 = x_ref[...]                                        # (Nb, H, L)

    # ---- H-shifted row sets via sublane rolls (XLU); wraps are masked by
    #      the zeroed top/bottom rows of the folded tap weights. ----
    rows = (pltpu.roll(x3, shift=1, axis=1),               # row h-1
            x3,                                            # row h
            pltpu.roll(x3, shift=(H - 1) % H, axis=1))     # row h+1

    def wshift(u, dw):
        # u[n, h, w*C+c] -> u[n, h, (w+dw)*C+c]; the lanes that wrap across
        # the image edge are zeroed by the weight's folded W-mask.
        if dw == 0:
            return u
        return pltpu.roll(u, shift=(-dw * C) % L, axis=2)  # XLU lane rotate

    # ---- depthwise 3x3 conv: one multiply per tap, three short add chains ----
    accs = []
    for kh in range(3):
        row = rows[kh]
        a = wshift(row, -1) * dww_ref[3 * kh + 0]
        a = a + row * dww_ref[3 * kh + 1]
        a = a + wshift(row, 1) * dww_ref[3 * kh + 2]
        accs.append(a)
    acc = (accs[0] + accs[1]) + accs[2]                    # (Nb, H, L)

    # ---- folded BatchNorm (scale already inside dww) + ReLU ----
    y = jnp.maximum(acc + dwb_ref[0], 0.0)                 # (Nb, H, L)

    # ---- Squeeze-and-Excitation (pool + 1/(H*W) folded into 1st matmul) ----
    s = jnp.sum(y, axis=1)                                 # (Nb, L)
    hid = jnp.maximum(
        jnp.dot(s, sew1_ref[...], preferred_element_type=jnp.float32)
        + seb1_ref[...], 0.0)                              # (Nb, M)
    gate = jax.nn.sigmoid(
        jnp.dot(hid, sew2_ref[...], preferred_element_type=jnp.float32)
        + seb2_ref[...])                                   # (Nb, L) per (w,c)
    yg = y * gate[:, None, :]                              # channel re-scale

    # ---- pointwise 1x1 conv (block-diag over w -> one MXU matmul);
    #      pw BN scale folded into pww, so only the bias add remains. ----
    z = jnp.dot(yg.reshape(Nb * H, L), pww_ref[...],
                preferred_element_type=jnp.float32)        # (Nb*H, Lo)
    z = (z + pwb_ref[0]).reshape(Nb, H, Lo)

    if residual:
        z = z + x3                                         # reuse loaded block
    out_ref[...] = z


def _num_tensorcores() -> int:
    """Best-effort TensorCore-per-chip count (v7x has 2, v5e/v6e have 1)."""
    try:
        dev = jax.devices()[0]
        n = int(getattr(dev, "num_cores", 1) or 1)
        kind = str(getattr(dev, "device_kind", "")).lower()
        if "v7" in kind:
            n = max(n, 2)
        return max(1, n)
    except Exception:
        return 1


def effi_dws_conv_unit_nhwc(x_nhwc, params, *, bn_eps=1e-5, block_batch=None):
    """NHWC-native Pallas implementation. x_nhwc: (N, H, W, C) float32."""
    N, H, W, C = x_nhwc.shape
    Co = params["pw_w"].shape[1]
    M = params["se_w1"].shape[1]
    residual = (C == Co)          # stride is always 1 in this unit's convs
    L, Lo = W * C, W * Co
    f32 = jnp.float32

    # Grid sizing: one step per TensorCore (v5e/v6e -> 1 step, v7x -> 2 steps
    # on the "parallel" axis).  Extra steps on a single-TC chip only add the
    # fixed per-step pipeline overhead.
    if block_batch is None:
        steps = min(_num_tensorcores(), N)
        block_batch = pl.cdiv(N, steps)
    Nb = max(1, min(block_batch, N))
    while N % Nb:
        Nb -= 1

    # NHWC -> (N, H, W*C) is a free reshape (no transpose, no HBM round trip).
    x = x_nhwc.astype(f32).reshape(N, H, L)

    # ---- fold eval-mode BatchNorm into scales / biases ----
    dw_scale = params["dw_gamma"] / jnp.sqrt(params["dw_var"] + bn_eps)
    dw_bias = params["dw_beta"] - params["dw_mean"] * dw_scale
    pw_scale = params["pw_gamma"] / jnp.sqrt(params["pw_var"] + bn_eps)
    pw_bias = params["pw_beta"] - params["pw_mean"] * pw_scale

    def lane_tile(v):                       # (K,) -> (1, W*K), lane = w*K + k
        return jnp.tile(v.astype(f32), (W,)).reshape(1, -1)

    # Depthwise tap weights with BN scale + H/W edge masks folded in: (9, H, L)
    dw_ws = params["dw_w"].astype(f32) * dw_scale[None, None, :]     # (3,3,C)
    h_idx = jnp.arange(H)
    w_idx = jnp.arange(W)
    taps = []
    for kh in range(3):
        hmask = ((h_idx + kh - 1 >= 0) & (h_idx + kh - 1 < H)).astype(f32)
        for kw in range(3):
            wmask = ((w_idx + kw - 1 >= 0) & (w_idx + kw - 1 < W)).astype(f32)
            lane_vec = (wmask[:, None] * dw_ws[kh, kw, :][None, :]).reshape(L)
            taps.append(hmask[:, None] * lane_vec[None, :])          # (H, L)
    dww = jnp.stack(taps, axis=0)                                    # (9, H, L)
    dwb = lane_tile(dw_bias)                                         # (1, L)

    # SE weights: pool normalization folded into the squeeze matmul.
    sew1 = jnp.tile(params["se_w1"].astype(f32), (W, 1)) * (1.0 / (H * W))
    seb1 = params["se_b1"].reshape(1, M).astype(f32)
    sew2 = jnp.tile(params["se_w2"].astype(f32), (1, W))             # (M, L)
    seb2 = lane_tile(params["se_b2"])                                # (1, L)

    # Pointwise conv as block-diagonal matrix with pw BN scale folded in.
    pw_w_scaled = params["pw_w"].astype(f32) * pw_scale[None, :].astype(f32)
    pww = jnp.kron(jnp.eye(W, dtype=f32), pw_w_scaled)               # (L, Lo)
    pwb = lane_tile(pw_bias)                                         # (1, Lo)

    ins = (x, dww, dwb, sew1, seb1, sew2, seb2, pww, pwb)

    def full_spec(arr):
        nd = arr.ndim
        return pl.BlockSpec(arr.shape, lambda n, _nd=nd: (0,) * _nd)

    in_specs = [pl.BlockSpec((Nb, H, L), lambda n: (n, 0, 0))]
    in_specs += [full_spec(a) for a in ins[1:]]
    # (Weights total ~0.2 MiB here; double-buffering them is negligible.  At
    #  real stage sizes mark them pipeline_mode=pl.Buffered(1) and raise
    #  vmem_limit_bytes for the activation blocks.)

    out = pl.pallas_call(
        functools.partial(_effi_dws_kernel, H=H, W=W, C=C, residual=residual),
        out_shape=jax.ShapeDtypeStruct((N, H, Lo), f32),
        grid_spec=pltpu.PrefetchScalarGridSpec(
            num_scalar_prefetch=0,
            grid=(N // Nb,),
            in_specs=in_specs,
            out_specs=pl.BlockSpec((Nb, H, Lo), lambda n: (n, 0, 0)),
        ),
        compiler_params=pltpu.CompilerParams(
            dimension_semantics=("parallel",)),
    )(*ins)

    return out.reshape(N, H, W, Co)


def effi_dws_conv_unit(x_nchw, params, *, bn_eps=1e-5, block_batch=None):
    """NCHW parity wrapper (matches the PyTorch module's layout).

    The two transposes below are full HBM round trips of the activation
    tensor; in an NHWC-native pipeline call effi_dws_conv_unit_nhwc directly
    and they disappear.
    """
    x_nhwc = jnp.transpose(x_nchw, (0, 2, 3, 1))
    out = effi_dws_conv_unit_nhwc(x_nhwc, params, bn_eps=bn_eps,
                                  block_batch=block_batch)
    return jnp.transpose(out, (0, 3, 1, 2))


def reference_nchw(x, p, bn_eps=1e-5):
    """Pure-JAX reference matching the PyTorch forward (eval-mode BN)."""
    N, C, H, W = x.shape
    dw_oihw = jnp.transpose(p["dw_w"], (2, 0, 1))[:, None, :, :]   # (C,1,3,3)
    y = lax.conv_general_dilated(
        x, dw_oihw, window_strides=(1, 1), padding=((1, 1), (1, 1)),
        feature_group_count=C, dimension_numbers=("NCHW", "OIHW", "NCHW"))
    s = p["dw_gamma"] / jnp.sqrt(p["dw_var"] + bn_eps)
    b = p["dw_beta"] - p["dw_mean"] * s
    y = jnp.maximum(y * s[None, :, None, None] + b[None, :, None, None], 0.0)
    pooled = jnp.mean(y, axis=(2, 3))                               # (N, C)
    h = jnp.maximum(pooled @ p["se_w1"] + p["se_b1"], 0.0)
    g = jax.nn.sigmoid(h @ p["se_w2"] + p["se_b2"])
    y = y * g[:, :, None, None]
    z = jnp.einsum("nchw,cd->ndhw", y, p["pw_w"])
    s2 = p["pw_gamma"] / jnp.sqrt(p["pw_var"] + bn_eps)
    b2 = p["pw_beta"] - p["pw_mean"] * s2
    z = z * s2[None, :, None, None] + b2[None, :, None, None]
    return z + x


def make_params(key, channels, out_channels, reduction=4):
    mid = channels // reduction
    ks = jax.random.split(key, 14)
    f32 = jnp.float32
    return {
        "dw_w": jax.random.normal(ks[0], (3, 3, channels), f32) * 0.2,
        "dw_gamma": jax.random.uniform(ks[1], (channels,), f32, 0.5, 1.5),
        "dw_beta": jax.random.normal(ks[2], (channels,), f32) * 0.05,
        "dw_mean": jax.random.normal(ks[3], (channels,), f32) * 0.05,
        "dw_var": jax.random.uniform(ks[4], (channels,), f32, 0.5, 1.5),
        "se_w1": jax.random.normal(ks[5], (channels, mid), f32) * 0.3,
        "se_b1": jax.random.normal(ks[6], (mid,), f32) * 0.05,
        "se_w2": jax.random.normal(ks[7], (mid, channels), f32) * 0.3,
        "se_b2": jax.random.normal(ks[8], (channels,), f32) * 0.05,
        "pw_w": jax.random.normal(ks[9], (channels, out_channels), f32) * 0.2,
        "pw_gamma": jax.random.uniform(ks[10], (out_channels,), f32, 0.5, 1.5),
        "pw_beta": jax.random.normal(ks[11], (out_channels,), f32) * 0.05,
        "pw_mean": jax.random.normal(ks[12], (out_channels,), f32) * 0.05,
        "pw_var": jax.random.uniform(ks[13], (out_channels,), f32, 0.5, 1.5),
    }


if __name__ == "__main__":
    # EffiDwsConvUnit(in_channels=8, out_channels=8, stride=1, bn_eps=1e-5,
    #                 activation=nn.ReLU, tf_mode=False) -> residual branch on.
    N, C, H, W = 4, 8, 16, 16          # W*C = 128 -> fully lane-dense blocks
    key = jax.random.PRNGKey(0)
    kx, kp = jax.random.split(key)
    x = jax.random.normal(kx, (N, C, H, W), jnp.float32)
    params = make_params(kp, C, C, reduction=4)

    ref = jax.block_until_ready(reference_nchw(x, params))

    # Primary NHWC-native path (no activation transposes around the kernel).
    x_nhwc = jnp.transpose(x, (0, 2, 3, 1))
    out_nhwc = jax.block_until_ready(effi_dws_conv_unit_nhwc(x_nhwc, params))
    ref_nhwc = jnp.transpose(ref, (0, 2, 3, 1))
    assert out_nhwc.shape == ref_nhwc.shape == (N, H, W, C)
    err1 = float(jnp.max(jnp.abs(out_nhwc - ref_nhwc)))
    assert jnp.allclose(out_nhwc, ref_nhwc, rtol=1e-4, atol=1e-4), err1

    # NCHW parity wrapper (matches the PyTorch module interface).
    out = jax.block_until_ready(effi_dws_conv_unit(x, params))
    assert out.shape == ref.shape == (N, C, H, W)
    err2 = float(jnp.max(jnp.abs(out - ref)))
    assert jnp.allclose(out, ref, rtol=1e-4, atol=1e-4), err2

    print("KERNEL_OK")
</pallas_src>

<mosaic_0001>
module attributes {stable_mosaic.version = 11 : i64} {
  func.func @_effi_dws_kernel(%arg0: i32, %arg1: memref<4x16x128xf32, #tpu.memory_space<vmem>>, %arg2: memref<9x16x128xf32, #tpu.memory_space<vmem>>, %arg3: memref<1x128xf32, #tpu.memory_space<vmem>>, %arg4: memref<128x2xf32, #tpu.memory_space<vmem>>, %arg5: memref<1x2xf32, #tpu.memory_space<vmem>>, %arg6: memref<2x128xf32, #tpu.memory_space<vmem>>, %arg7: memref<1x128xf32, #tpu.memory_space<vmem>>, %arg8: memref<128x128xf32, #tpu.memory_space<vmem>>, %arg9: memref<1x128xf32, #tpu.memory_space<vmem>>, %arg10: memref<4x16x128xf32, #tpu.memory_space<vmem>>) attributes {dimension_semantics = [#tpu.dimension_semantics<parallel>], iteration_bounds = array<i64: 1>, scalar_prefetch = 0 : i64, scratch_operands = 0 : i64, tpu.core_type = #tpu.core_type<tc>, window_params = [{transform_indices = @transform_0, window_bounds = array<i64: 4, 16, 128>}, {pipeline_mode = #tpu.pipeline_mode<synchronous>, transform_indices = @transform_1, window_bounds = array<i64: 9, 16, 128>}, {pipeline_mode = #tpu.pipeline_mode<synchronous>, transform_indices = @transform_2, window_bounds = array<i64: 1, 128>}, {pipeline_mode = #tpu.pipeline_mode<synchronous>, transform_indices = @transform_3, window_bounds = array<i64: 128, 2>}, {pipeline_mode = #tpu.pipeline_mode<synchronous>, transform_indices = @transform_4, window_bounds = array<i64: 1, 2>}, {pipeline_mode = #tpu.pipeline_mode<synchronous>, transform_indices = @transform_5, window_bounds = array<i64: 2, 128>}, {pipeline_mode = #tpu.pipeline_mode<synchronous>, transform_indices = @transform_6, window_bounds = array<i64: 1, 128>}, {pipeline_mode = #tpu.pipeline_mode<synchronous>, transform_indices = @transform_7, window_bounds = array<i64: 128, 128>}, {pipeline_mode = #tpu.pipeline_mode<synchronous>, transform_indices = @transform_8, window_bounds = array<i64: 1, 128>}, {transform_indices = @transform_9, window_bounds = array<i64: 4, 16, 128>}]} {
    %c0 = arith.constant 0 : index
    %c0_0 = arith.constant 0 : index
    %c0_1 = arith.constant 0 : index
    %0 = vector.load %arg1[%c0, %c0_0, %c0_1] : memref<4x16x128xf32, #tpu.memory_space<vmem>>, vector<4x16x128xf32>
    %c1_i32 = arith.constant 1 : i32
    %1 = tpu.dynamic_rotate %0 by %c1_i32 dim 1 : vector<4x16x128xf32>, i32 -> vector<4x16x128xf32>
    %c15_i32 = arith.constant 15 : i32
    %2 = tpu.dynamic_rotate %0 by %c15_i32 dim 1 : vector<4x16x128xf32>, i32 -> vector<4x16x128xf32>
    %c8_i32 = arith.constant 8 : i32
    %3 = tpu.dynamic_rotate %1 by %c8_i32 dim 2 : vector<4x16x128xf32>, i32 -> vector<4x16x128xf32>
    %c0_2 = arith.constant 0 : index
    %c0_3 = arith.constant 0 : index
    %c0_4 = arith.constant 0 : index
    %4 = vector.load %arg2[%c0_2, %c0_3, %c0_4] : memref<9x16x128xf32, #tpu.memory_space<vmem>>, vector<1x16x128xf32>
    %5 = vector.shape_cast %4 : vector<1x16x128xf32> to vector<16x128xf32>
    %6 = vector.shape_cast %5 : vector<16x128xf32> to vector<1x16x128xf32>
    %7 = vector.broadcast %6 : vector<1x16x128xf32> to vector<4x16x128xf32>
    %8 = arith.mulf %3, %7 : vector<4x16x128xf32>
    %c1 = arith.constant 1 : index
    %c0_5 = arith.constant 0 : index
    %c0_6 = arith.constant 0 : index
    %9 = vector.load %arg2[%c1, %c0_5, %c0_6] : memref<9x16x128xf32, #tpu.memory_space<vmem>>, vector<1x16x128xf32>
    %10 = vector.shape_cast %9 : vector<1x16x128xf32> to vector<16x128xf32>
    %11 = vector.shape_cast %10 : vector<16x128xf32> to vector<1x16x128xf32>
    %12 = vector.broadcast %11 : vector<1x16x128xf32> to vector<4x16x128xf32>
    %13 = arith.mulf %1, %12 : vector<4x16x128xf32>
    %14 = arith.addf %8, %13 : vector<4x16x128xf32>
    %c120_i32 = arith.constant 120 : i32
    %15 = tpu.dynamic_rotate %1 by %c120_i32 dim 2 : vector<4x16x128xf32>, i32 -> vector<4x16x128xf32>
    %c2 = arith.constant 2 : index
    %c0_7 = arith.constant 0 : index
    %c0_8 = arith.constant 0 : index
    %16 = vector.load %arg2[%c2, %c0_7, %c0_8] : memref<9x16x128xf32, #tpu.memory_space<vmem>>, vector<1x16x128xf32>
    %17 = vector.shape_cast %16 : vector<1x16x128xf32> to vector<16x128xf32>
    %18 = vector.shape_cast %17 : vector<16x128xf32> to vector<1x16x128xf32>
    %19 = vector.broadcast %18 : vector<1x16x128xf32> to vector<4x16x128xf32>
    %20 = arith.mulf %15, %19 : vector<4x16x128xf32>
    %21 = arith.addf %14, %20 : vector<4x16x128xf32>
    %c8_i32_9 = arith.constant 8 : i32
    %22 = tpu.dynamic_rotate %0 by %c8_i32_9 dim 2 : vector<4x16x128xf32>, i32 -> vector<4x16x128xf32>
    %c3 = arith.constant 3 : index
    %c0_10 = arith.constant 0 : index
    %c0_11 = arith.constant 0 : index
    %23 = vector.load %arg2[%c3, %c0_10, %c0_11] : memref<9x16x128xf32, #tpu.memory_space<vmem>>, vector<1x16x128xf32>
    %24 = vector.shape_cast %23 : vector<1x16x128xf32> to vector<16x128xf32>
    %25 = vector.shape_cast %24 : vector<16x128xf32> to vector<1x16x128xf32>
    %26 = vector.broadcast %25 : vector<1x16x128xf32> to vector<4x16x128xf32>
    %27 = arith.mulf %22, %26 : vector<4x16x128xf32>
    %c4 = arith.constant 4 : index
    %c0_12 = arith.constant 0 : index
    %c0_13 = arith.constant 0 : index
    %28 = vector.load %arg2[%c4, %c0_12, %c0_13] : memref<9x16x128xf32, #tpu.memory_space<vmem>>, vector<1x16x128xf32>
    %29 = vector.shape_cast %28 : vector<1x16x128xf32> to vector<16x128xf32>
    %30 = vector.shape_cast %29 : vector<16x128xf32> to vector<1x16x128xf32>
    %31 = vector.broadcast %30 : vector<1x16x128xf32> to vector<4x16x128xf32>
    %32 = arith.mulf %0, %31 : vector<4x16x128xf32>
    %33 = arith.addf %27, %32 : vector<4x16x128xf32>
    %c120_i32_14 = arith.constant 120 : i32
    %34 = tpu.dynamic_rotate %0 by %c120_i32_14 dim 2 : vector<4x16x128xf32>, i32 -> vector<4x16x128xf32>
    %c5 = arith.constant 5 : index
    %c0_15 = arith.constant 0 : index
    %c0_16 = arith.constant 0 : index
    %35 = vector.load %arg2[%c5, %c0_15, %c0_16] : memref<9x16x128xf32, #tpu.memory_space<vmem>>, vector<1x16x128xf32>
    %36 = vector.shape_cast %35 : vector<1x16x128xf32> to vector<16x128xf32>
    %37 = vector.shape_cast %36 : vector<16x128xf32> to vector<1x16x128xf32>
    %38 = vector.broadcast %37 : vector<1x16x128xf32> to vector<4x16x128xf32>
    %39 = arith.mulf %34, %38 : vector<4x16x128xf32>
    %40 = arith.addf %33, %39 : vector<4x16x128xf32>
    %c8_i32_17 = arith.constant 8 : i32
    %41 = tpu.dynamic_rotate %2 by %c8_i32_17 dim 2 : vector<4x16x128xf32>, i32 -> vector<4x16x128xf32>
    %c6 = arith.constant 6 : index
    %c0_18 = arith.constant 0 : index
    %c0_19 = arith.constant 0 : index
    %42 = vector.load %arg2[%c6, %c0_18, %c0_19] : memref<9x16x128xf32, #tpu.memory_space<vmem>>, vector<1x16x128xf32>
    %43 = vector.shape_cast %42 : vector<1x16x128xf32> to vector<16x128xf32>
    %44 = vector.shape_cast %43 : vector<16x128xf32> to vector<1x16x128xf32>
    %45 = vector.broadcast %44 : vector<1x16x128xf32> to vector<4x16x128xf32>
    %46 = arith.mulf %41, %45 : vector<4x16x128xf32>
    %c7 = arith.constant 7 : index
    %c0_20 = arith.constant 0 : index
    %c0_21 = arith.constant 0 : index
    %47 = vector.load %arg2[%c7, %c0_20, %c0_21] : memref<9x16x128xf32, #tpu.memory_space<vmem>>, vector<1x16x128xf32>
    %48 = vector.shape_cast %47 : vector<1x16x128xf32> to vector<16x128xf32>
    %49 = vector.shape_cast %48 : vector<16x128xf32> to vector<1x16x128xf32>
    %50 = vector.broadcast %49 : vector<1x16x128xf32> to vector<4x16x128xf32>
    %51 = arith.mulf %2, %50 : vector<4x16x128xf32>
    %52 = arith.addf %46, %51 : vector<4x16x128xf32>
    %c120_i32_22 = arith.constant 120 : i32
    %53 = tpu.dynamic_rotate %2 by %c120_i32_22 dim 2 : vector<4x16x128xf32>, i32 -> vector<4x16x128xf32>
    %c8 = arith.constant 8 : index
    %c0_23 = arith.constant 0 : index
    %c0_24 = arith.constant 0 : index
    %54 = vector.load %arg2[%c8, %c0_23, %c0_24] : memref<9x16x128xf32, #tpu.memory_space<vmem>>, vector<1x16x128xf32>
    %55 = vector.shape_cast %54 : vector<1x16x128xf32> to vector<16x128xf32>
    %56 = vector.shape_cast %55 : vector<16x128xf32> to vector<1x16x128xf32>
    %57 = vector.broadcast %56 : vector<1x16x128xf32> to vector<4x16x128xf32>
    %58 = arith.mulf %53, %57 : vector<4x16x128xf32>
    %59 = arith.addf %52, %58 : vector<4x16x128xf32>
    %60 = arith.addf %21, %40 : vector<4x16x128xf32>
    %61 = arith.addf %60, %59 : vector<4x16x128xf32>
    %c0_25 = arith.constant 0 : index
    %c0_26 = arith.constant 0 : index
    %62 = vector.load %arg3[%c0_25, %c0_26] : memref<1x128xf32, #tpu.memory_space<vmem>>, vector<1x128xf32>
    %63 = vector.shape_cast %62 : vector<1x128xf32> to vector<128xf32>
    %64 = vector.shape_cast %63 : vector<128xf32> to vector<1x1x128xf32>
    %65 = vector.broadcast %64 : vector<1x1x128xf32> to vector<4x16x128xf32>
    %66 = arith.addf %61, %65 : vector<4x16x128xf32>
    %cst = arith.constant 0.000000e+00 : f32
    %67 = vector.broadcast %cst : f32 to vector<4x16x128xf32>
    %68 = arith.maximumf %66, %67 : vector<4x16x128xf32>
    %cst_27 = arith.constant dense<0.000000e+00> : vector<4x128xf32>
    %69 = vector.multi_reduction <add>, %68, %cst_27 [1] : vector<4x16x128xf32> to vector<4x128xf32>
    %c0_28 = arith.constant 0 : index
    %c0_29 = arith.constant 0 : index
    %70 = vector.load %arg4[%c0_28, %c0_29] : memref<128x2xf32, #tpu.memory_space<vmem>>, vector<128x2xf32>
    %cst_30 = arith.constant dense<0.000000e+00> : vector<4x2xf32>
    %71 = tpu.matmul %69, %70, %cst_30 {dimension_numbers = #tpu.dot_dimension_numbers<[1], [0], [0], [1], [0, 0, 1, 1], [], []>} : vector<4x128xf32>, vector<128x2xf32>, vector<4x2xf32> -> vector<4x2xf32>
    %c0_31 = arith.constant 0 : index
    %c0_32 = arith.constant 0 : index
    %72 = vector.load %arg5[%c0_31, %c0_32] : memref<1x2xf32, #tpu.memory_space<vmem>>, vector<1x2xf32>
    %73 = vector.broadcast %72 : vector<1x2xf32> to vector<4x2xf32>
    %74 = arith.addf %71, %73 : vector<4x2xf32>
    %cst_33 = arith.constant 0.000000e+00 : f32
    %75 = vector.broadcast %cst_33 : f32 to vector<4x2xf32>
    %76 = arith.maximumf %74, %75 : vector<4x2xf32>
    %c0_34 = arith.constant 0 : index
    %c0_35 = arith.constant 0 : index
    %77 = vector.load %arg6[%c0_34, %c0_35] : memref<2x128xf32, #tpu.memory_space<vmem>>, vector<2x128xf32>
    %cst_36 = arith.constant dense<0.000000e+00> : vector<4x128xf32>
    %78 = tpu.matmul %76, %77, %cst_36 {dimension_numbers = #tpu.dot_dimension_numbers<[1], [0], [0], [1], [0, 0, 1, 1], [], []>} : vector<4x2xf32>, vector<2x128xf32>, vector<4x128xf32> -> vector<4x128xf32>
    %c0_37 = arith.constant 0 : index
    %c0_38 = arith.constant 0 : index
    %79 = vector.load %arg7[%c0_37, %c0_38] : memref<1x128xf32, #tpu.memory_space<vmem>>, vector<1x128xf32>
    %80 = vector.broadcast %79 : vector<1x128xf32> to vector<4x128xf32>
    %81 = arith.addf %78, %80 : vector<4x128xf32>
    %82 = arith.negf %81 : vector<4x128xf32>
    %83 = math.exp %82 : vector<4x128xf32>
    %cst_39 = arith.constant 1.000000e+00 : f32
    %84 = vector.broadcast %cst_39 : f32 to vector<4x128xf32>
    %85 = arith.addf %84, %83 : vector<4x128xf32>
    %86 = arith.divf %84, %85 : vector<4x128xf32>
    %87 = vector.shape_cast %86 : vector<4x128xf32> to vector<4x1x128xf32>
    %88 = vector.broadcast %87 : vector<4x1x128xf32> to vector<4x16x128xf32>
    %89 = arith.mulf %68, %88 : vector<4x16x128xf32>
    %90 = vector.shape_cast %89 : vector<4x16x128xf32> to vector<64x128xf32>
    %c0_40 = arith.constant 0 : index
    %c0_41 = arith.constant 0 : index
    %91 = vector.load %arg8[%c0_40, %c0_41] : memref<128x128xf32, #tpu.memory_space<vmem>>, vector<128x128xf32>
    %cst_42 = arith.constant dense<0.000000e+00> : vector<64x128xf32>
    %92 = tpu.matmul %90, %91, %cst_42 {dimension_numbers = #tpu.dot_dimension_numbers<[1], [0], [0], [1], [0, 0, 1, 1], [], []>} : vector<64x128xf32>, vector<128x128xf32>, vector<64x128xf32> -> vector<64x128xf32>
    %c0_43 = arith.constant 0 : index
    %c0_44 = arith.constant 0 : index
    %93 = vector.load %arg9[%c0_43, %c0_44] : memref<1x128xf32, #tpu.memory_space<vmem>>, vector<1x128xf32>
    %94 = vector.shape_cast %93 : vector<1x128xf32> to vector<128xf32>
    %95 = vector.shape_cast %94 : vector<128xf32> to vector<1x128xf32>
    %96 = vector.broadcast %95 : vector<1x128xf32> to vector<64x128xf32>
    %97 = arith.addf %92, %96 : vector<64x128xf32>
    %98 = vector.shape_cast %97 : vector<64x128xf32> to vector<4x16x128xf32>
    %99 = arith.addf %98, %0 : vector<4x16x128xf32>
    %c0_45 = arith.constant 0 : index
    %c0_46 = arith.constant 0 : index
    %c0_47 = arith.constant 0 : index
    %100 = vector.load %arg10[%c0_45, %c0_46, %c0_47] : memref<4x16x128xf32, #tpu.memory_space<vmem>>, vector<4x16x128xf32>
    tpu.vector_store %arg10[%c0_45, %c0_46, %c0_47], %99 {strides = array<i32>} : memref<4x16x128xf32, #tpu.memory_space<vmem>>, vector<4x16x128xf32>,
    return
  }
  func.func @transform_0(%arg0: i32) -> (i32, i32, i32) {
    %c0_i32 = arith.constant 0 : i32
    %c0_i32_0 = arith.constant 0 : i32
    %c0_i32_1 = arith.constant 0 : i32
    return %arg0, %c0_i32, %c0_i32_0 : i32, i32, i32
  }
  func.func @transform_1(%arg0: i32) -> (i32, i32, i32) {
    %c0_i32 = arith.constant 0 : i32
    %c0_i32_0 = arith.constant 0 : i32
    %c0_i32_1 = arith.constant 0 : i32
    %c0_i32_2 = arith.constant 0 : i32
    return %c0_i32, %c0_i32_0, %c0_i32_1 : i32, i32, i32
  }
  func.func @transform_2(%arg0: i32) -> (i32, i32) {
    %c0_i32 = arith.constant 0 : i32
    %c0_i32_0 = arith.constant 0 : i32
    %c0_i32_1 = arith.constant 0 : i32
    return %c0_i32, %c0_i32_0 : i32, i32
  }
  func.func @transform_3(%arg0: i32) -> (i32, i32) {
    %c0_i32 = arith.constant 0 : i32
    %c0_i32_0 = arith.constant 0 : i32
    %c0_i32_1 = arith.constant 0 : i32
    return %c0_i32, %c0_i32_0 : i32, i32
  }
  func.func @transform_4(%arg0: i32) -> (i32, i32) {
    %c0_i32 = arith.constant 0 : i32
    %c0_i32_0 = arith.constant 0 : i32
    %c0_i32_1 = arith.constant 0 : i32
    return %c0_i32, %c0_i32_0 : i32, i32
  }
  func.func @transform_5(%arg0: i32) -> (i32, i32) {
    %c0_i32 = arith.constant 0 : i32
    %c0_i32_0 = arith.constant 0 : i32
    %c0_i32_1 = arith.constant 0 : i32
    return %c0_i32, %c0_i32_0 : i32, i32
  }
  func.func @transform_6(%arg0: i32) -> (i32, i32) {
    %c0_i32 = arith.constant 0 : i32
    %c0_i32_0 = arith.constant 0 : i32
    %c0_i32_1 = arith.constant 0 : i32
    return %c0_i32, %c0_i32_0 : i32, i32
  }
  func.func @transform_7(%arg0: i32) -> (i32, i32) {
    %c0_i32 = arith.constant 0 : i32
    %c0_i32_0 = arith.constant 0 : i32
    %c0_i32_1 = arith.constant 0 : i32
    return %c0_i32, %c0_i32_0 : i32, i32
  }
  func.func @transform_8(%arg0: i32) -> (i32, i32) {
    %c0_i32 = arith.constant 0 : i32
    %c0_i32_0 = arith.constant 0 : i32
    %c0_i32_1 = arith.constant 0 : i32
    return %c0_i32, %c0_i32_0 : i32, i32
  }
  func.func @transform_9(%arg0: i32) -> (i32, i32, i32) {
    %c0_i32 = arith.constant 0 : i32
    %c0_i32_0 = arith.constant 0 : i32
    %c0_i32_1 = arith.constant 0 : i32
    return %arg0, %c0_i32, %c0_i32_0 : i32, i32, i32
  }
}

</mosaic_0001>

<llo_original>
// kernel: tpu_custom_call.1
$region0: #{tpu_custom_call.1}
  #allocation0 [shape = 'u32[]', space=smem, size = 0x4, offset = 0x4, fixed_abs, tag = 'smem constant byte address 0x4 - core index']
  #allocation1 [shape = 'u32[144,128]{1,0:T(1,128)}', space=vmem, size = 0x12000, scoped, tag = 'internal scratch']
  %s0 = inlined_call_operand.hbm [shape: f32[4,16,128], index: 0, kind: input, shape index: {}]
  %s1 = inlined_call_operand.hbm [shape: f32[9,16,128], index: 1, kind: input, shape index: {}]
  %s2 = inlined_call_operand.vmem [shape: f32[1,128], index: 2, kind: input, shape index: {}]
  %s3 = inlined_call_operand.vmem [shape: f32[128,2], index: 3, kind: input, shape index: {}]
  %s4 = inlined_call_operand.vmem [shape: f32[1,2], index: 4, kind: input, shape index: {}]
  %s5 = inlined_call_operand.vmem [shape: f32[2,128], index: 5, kind: input, shape index: {}]
  %s6 = inlined_call_operand.vmem [shape: f32[1,128], index: 6, kind: input, shape index: {}]
  %s7 = inlined_call_operand.vmem [shape: f32[128,128], index: 7, kind: input, shape index: {}]
  %s8 = inlined_call_operand.vmem [shape: f32[1,128], index: 8, kind: input, shape index: {}]
  %s9 = inlined_call_operand.hbm [shape: f32[4,16,128], index: 9, kind: output, shape index: {}]
  %s10 = sld [smem:[#allocation0]]
  $region54: #{tpu_custom_call.1} parent=0
    _
  %s12 = ssub.s32 1, %s10
  %s13 = scalar_select 0, %s12, %s10
  $region1: #{tpu_custom_call.1} parent=0
    #allocation2 [shape = 'u8[32768]{0}', space=vmem, size = 0x8000, scoped, tag = 'input window, operand 0, single buffered']
    #allocation3 [shape = 's32[1]{0}', space=sflag, size = 0x4, scoped, tag = 'scoped memory for tpu_custom_call.1']
    #allocation4 [shape = 's32[1]{0}', space=sflag, size = 0x4, scoped, tag = 'scoped memory for tpu_custom_call.1']
    #allocation5 [shape = 'u8[73728]{0}', space=vmem, size = 0x12000, scoped, tag = 'input window, operand 1, single buffered']
    #allocation6 [shape = 's32[1]{0}', space=sflag, size = 0x4, scoped, tag = 'scoped memory for tpu_custom_call.1']
    #allocation7 [shape = 'u8[32768]{0}', space=vmem, size = 0x8000, scoped, tag = 'output window, operand 0, single buffered']
    %14 = vsyncpa [#allocation3], 0
    %15 = vsyncpa [#allocation6], 0
    %16 = vsyncpa [#allocation4], 0
    // Predicated region
    $region2: #{tpu_custom_call.1} parent=1 // pred_check
      _
    $region3: #{tpu_custom_call.1} parent=1 // pred_check_branch
      %18 = sbr.rel (0) target = $region5
    $region4: #{tpu_custom_call.1} parent=1 // pred_region
      %s20 = ssub.s32 1024, 1024
      %21 = vsyncadd [#allocation3], %s20
      %s22 = sshll.u32 [#allocation2], 4
      %s23 = int_to_ptr.vmem [resolvable:$true] %s22
      %28 = dma.hbm_to_vmem [thread:$0]  %s0, 1024, %s23, [#allocation3], 128, 128, 8
    $region5: #{tpu_custom_call.1} parent=1 // pred_fallthru
      _
    // Predicated region
    $region6: #{tpu_custom_call.1} parent=1 // pred_check
      _
    $region7: #{tpu_custom_call.1} parent=1 // pred_check_branch
      %30 = sbr.rel (0) target = $region9
    $region8: #{tpu_custom_call.1} parent=1 // pred_region
      %s32 = ssub.s32 2304, 2304
      %33 = vsyncadd [#allocation6], %s32
      %s34 = sshll.u32 [#allocation5], 4
      %s35 = int_to_ptr.vmem [resolvable:$true] %s34
      %40 = dma.hbm_to_vmem [thread:$0]  %s1, 2304, %s35, [#allocation6], 128, 128, 8
    $region9: #{tpu_custom_call.1} parent=1 // pred_fallthru
      _
    // Predicated region
    $region10: #{tpu_custom_call.1} parent=1 // pred_check
      _
    $region11: #{tpu_custom_call.1} parent=1 // pred_check_branch
      %42 = sbr.rel (0) target = $region13
    $region12: #{tpu_custom_call.1} parent=1 // pred_region
      _
    $region13: #{tpu_custom_call.1} parent=1 // pred_fallthru
      _
    // Predicated region
    $region14: #{tpu_custom_call.1} parent=1 // pred_check
      _
    $region15: #{tpu_custom_call.1} parent=1 // pred_check_branch
      %44 = sbr.rel (0) target = $region17
    $region16: #{tpu_custom_call.1} parent=1 // pred_region
      _
    $region17: #{tpu_custom_call.1} parent=1 // pred_fallthru
      _
    // Predicated region
    $region18: #{tpu_custom_call.1} parent=1 // pred_check
      _
    $region19: #{tpu_custom_call.1} parent=1 // pred_check_branch
      %46 = sbr.rel (0) target = $region21
    $region20: #{tpu_custom_call.1} parent=1 // pred_region
      _
    $region21: #{tpu_custom_call.1} parent=1 // pred_fallthru
      _
    // Predicated region
    $region22: #{tpu_custom_call.1} parent=1 // pred_check
      _
    $region23: #{tpu_custom_call.1} parent=1 // pred_check_branch
      %48 = sbr.rel (0) target = $region25
    $region24: #{tpu_custom_call.1} parent=1 // pred_region
      _
    $region25: #{tpu_custom_call.1} parent=1 // pred_fallthru
      _
    // Predicated region
    $region26: #{tpu_custom_call.1} parent=1 // pred_check
      _
    $region27: #{tpu_custom_call.1} parent=1 // pred_check_branch
      %50 = sbr.rel (0) target = $region29
    $region28: #{tpu_custom_call.1} parent=1 // pred_region
      _
    $region29: #{tpu_custom_call.1} parent=1 // pred_fallthru
      _
    // Predicated region
    $region30: #{tpu_custom_call.1} parent=1 // pred_check
      _
    $region31: #{tpu_custom_call.1} parent=1 // pred_check_branch
      %52 = sbr.rel (0) target = $region33
    $region32: #{tpu_custom_call.1} parent=1 // pred_region
      _
    $region33: #{tpu_custom_call.1} parent=1 // pred_fallthru
      _
    // Predicated region
    $region34: #{tpu_custom_call.1} parent=1 // pred_check
      _
    $region35: #{tpu_custom_call.1} parent=1 // pred_check_branch
      %54 = sbr.rel (0) target = $region37
    $region36: #{tpu_custom_call.1} parent=1 // pred_region
      _
    $region37: #{tpu_custom_call.1} parent=1 // pred_fallthru
      _
    // Predicated region
    $region38: #{tpu_custom_call.1} parent=1 // pred_check
      _
    $region39: #{tpu_custom_call.1} parent=1 // pred_check_branch
      %56 = sbr.rel (0) target = $region41
    $region40: #{tpu_custom_call.1} parent=1 // pred_region
      %57 = dma.done [#allocation3], 1024
    $region41: #{tpu_custom_call.1} parent=1 // pred_fallthru
      _
    // Predicated region
    $region42: #{tpu_custom_call.1} parent=1 // pred_check
      _
    $region43: #{tpu_custom_call.1} parent=1 // pred_check_branch
      %59 = sbr.rel (0) target = $region45
    $region44: #{tpu_custom_call.1} parent=1 // pred_region
      %60 = dma.done [#allocation6], 2304
    $region45: #{tpu_custom_call.1} parent=1 // pred_fallthru
      _
    %v61 = vld [vmem:[#allocation2] sm:$0xff]
    %v62 = vld [vmem:[#allocation2 + $0x8] sm:$0xff]
    %v63 = vld [vmem:[#allocation2 + $0x10] sm:$0xff]
    %v64 = vld [vmem:[#allocation2 + $0x18] sm:$0xff]
    %v65 = vld [vmem:[#allocation2 + $0x20] sm:$0xff]
    %v66 = vld [vmem:[#allocation2 + $0x28] sm:$0xff]
    %v67 = vld [vmem:[#allocation2 + $0x30] sm:$0xff]
    %v68 = vld [vmem:[#allocation2 + $0x38] sm:$0xff]
    %v69 = vrot.slane %v61, 7
    %v70 = vrot.slane %v63, 7
    %v71 = vrot.slane %v65, 7
    %v72 = vrot.slane %v67, 7
    %v73 = vrot.slane %v62, 7
    %v74 = vrot.slane %v64, 7
    %v75 = vrot.slane %v66, 7
    %v76 = vrot.slane %v68, 7
    %v77 = vlaneseq
    %v78 = vshrl.u32 %v77, 7
    %vm79 = vcmp.lt.s32.totalorder %v78, 1
    %v80 = vsel %vm79, %v69, %v73
    %v81 = vsel %vm79, %v70, %v74
    %v82 = vsel %vm79, %v71, %v75
    %v83 = vsel %vm79, %v72, %v76
    %v84 = vsel %vm79, %v73, %v69
    %v85 = vsel %vm79, %v74, %v70
    %v86 = vsel %vm79, %v75, %v71
    %v87 = vsel %vm79, %v76, %v72
    %v88 = vrot.slane %v61, 1
    %v89 = vrot.slane %v63, 1
    %v90 = vrot.slane %v65, 1
    %v91 = vrot.slane %v67, 1
    %v92 = vrot.slane %v62, 1
    %v93 = vrot.slane %v64, 1
    %v94 = vrot.slane %v66, 1
    %v95 = vrot.slane %v68, 1
    %vm96 = vcmp.lt.s32.totalorder %v78, 7
    %v97 = vsel %vm96, %v88, %v92
    %v98 = vsel %vm96, %v89, %v93
    %v99 = vsel %vm96, %v90, %v94
    %v100 = vsel %vm96, %v91, %v95
    %v101 = vsel %vm96, %v92, %v88
    %v102 = vsel %vm96, %v93, %v89
    %v103 = vsel %vm96, %v94, %v90
    %v104 = vsel %vm96, %v95, %v91
    %105 = vrot.lane.b32.xlu0 %v84, 8
    %v106 = vpop.permute.xlu0 %105
    %107 = vrot.lane.b32.xlu0 %v80, 8
    %v108 = vpop.permute.xlu0 %107
    %109 = vrot.lane.b32.xlu0 %v85, 8
    %v110 = vpop.permute.xlu0 %109
    %111 = vrot.lane.b32.xlu0 %v81, 8
    %v112 = vpop.permute.xlu0 %111
    %113 = vrot.lane.b32.xlu0 %v86, 8
    %v114 = vpop.permute.xlu0 %113
    %115 = vrot.lane.b32.xlu0 %v82, 8
    %v116 = vpop.permute.xlu0 %115
    %117 = vrot.lane.b32.xlu0 %v87, 8
    %v118 = vpop.permute.xlu0 %117
    %119 = vrot.lane.b32.xlu0 %v83, 8
    %v120 = vpop.permute.xlu0 %119
    %v121 = vld [vmem:[#allocation5] sm:$0xff]
    %v122 = vld [vmem:[#allocation5 + $0x8] sm:$0xff]
    %v123 = vmul.f32 %v106, %v121
    %v124 = vmul.f32 %v108, %v122
    %v125 = vmul.f32 %v110, %v121
    %v126 = vmul.f32 %v112, %v122
    %v127 = vmul.f32 %v114, %v121
    %v128 = vmul.f32 %v116, %v122
    %v129 = vmul.f32 %v118, %v121
    %v130 = vmul.f32 %v120, %v122
    %s131 = scalar_lea.vmem [#allocation5], 16
    %v132 = vld [vmem:[%s131] sm:$0xff]
    %v133 = vld [vmem:[%s131 + $0x8] sm:$0xff]
    %v134 = vmul.f32 %v84, %v132
    %v135 = vmul.f32 %v80, %v133
    %v136 = vmul.f32 %v85, %v132
    %v137 = vmul.f32 %v81, %v133
    %v138 = vmul.f32 %v86, %v132
    %v139 = vmul.f32 %v82, %v133
    %v140 = vmul.f32 %v87, %v132
    %v141 = vmul.f32 %v83, %v133
    %v142 = vadd.f32 %v123, %v134
    %v143 = vadd.f32 %v124, %v135
    %v144 = vadd.f32 %v125, %v136
    %v145 = vadd.f32 %v126, %v137
    %v146 = vadd.f32 %v127, %v138
    %v147 = vadd.f32 %v128, %v139
    %v148 = vadd.f32 %v129, %v140
    %v149 = vadd.f32 %v130, %v141
    %150 = vrot.lane.b32.xlu0 %v84, 120
    %v151 = vpop.permute.xlu0 %150
    %152 = vrot.lane.b32.xlu0 %v80, 120
    %v153 = vpop.permute.xlu0 %152
    %154 = vrot.lane.b32.xlu0 %v85, 120
    %v155 = vpop.permute.xlu0 %154
    %156 = vrot.lane.b32.xlu0 %v81, 120
    %v157 = vpop.permute.xlu0 %156
    %158 = vrot.lane.b32.xlu0 %v86, 120
    %v159 = vpop.permute.xlu0 %158
    %160 = vrot.lane.b32.xlu0 %v82, 120
    %v161 = vpop.permute.xlu0 %160
    %162 = vrot.lane.b32.xlu0 %v87, 120
    %v163 = vpop.permute.xlu0 %162
    %164 = vrot.lane.b32.xlu0 %v83, 120
    %v165 = vpop.permute.xlu0 %164
    %s166 = scalar_lea.vmem [#allocation5], 32
    %v167 = vld [vmem:[%s166] sm:$0xff]
    %v168 = vld [vmem:[%s166 + $0x8] sm:$0xff]
    %v169 = vmul.f32 %v151, %v167
    %v170 = vmul.f32 %v153, %v168
    %v171 = vmul.f32 %v155, %v167
    %v172 = vmul.f32 %v157, %v168
    %v173 = vmul.f32 %v159, %v167
    %v174 = vmul.f32 %v161, %v168
    %v175 = vmul.f32 %v163, %v167
    %v176 = vmul.f32 %v165, %v168
    %v177 = vadd.f32 %v142, %v169
    %v178 = vadd.f32 %v143, %v170
    %v179 = vadd.f32 %v144, %v171
    %v180 = vadd.f32 %v145, %v172
    %v181 = vadd.f32 %v146, %v173
    %v182 = vadd.f32 %v147, %v174
    %v183 = vadd.f32 %v148, %v175
    %v184 = vadd.f32 %v149, %v176
    %185 = vrot.lane.b32.xlu0 %v61, 8
    %v186 = vpop.permute.xlu0 %185
    %187 = vrot.lane.b32.xlu0 %v62, 8
    %v188 = vpop.permute.xlu0 %187
    %189 = vrot.lane.b32.xlu0 %v63, 8
    %v190 = vpop.permute.xlu0 %189
    %191 = vrot.lane.b32.xlu0 %v64, 8
    %v192 = vpop.permute.xlu0 %191
    %193 = vrot.lane.b32.xlu0 %v65, 8
    %v194 = vpop.permute.xlu0 %193
    %195 = vrot.lane.b32.xlu0 %v66, 8
    %v196 = vpop.permute.xlu0 %195
    %197 = vrot.lane.b32.xlu0 %v67, 8
    %v198 = vpop.permute.xlu0 %197
    %199 = vrot.lane.b32.xlu0 %v68, 8
    %v200 = vpop.permute.xlu0 %199
    %s201 = scalar_lea.vmem [#allocation5], 48
    %v202 = vld [vmem:[%s201] sm:$0xff]
    %v203 = vld [vmem:[%s201 + $0x8] sm:$0xff]
    %v204 = vmul.f32 %v186, %v202
    %v205 = vmul.f32 %v188, %v203
    %v206 = vmul.f32 %v190, %v202
    %v207 = vmul.f32 %v192, %v203
    %v208 = vmul.f32 %v194, %v202
    %v209 = vmul.f32 %v196, %v203
    %v210 = vmul.f32 %v198, %v202
    %v211 = vmul.f32 %v200, %v203
    %s212 = scalar_lea.vmem [#allocation5], 64
    %v213 = vld [vmem:[%s212] sm:$0xff]
    %v214 = vld [vmem:[%s212 + $0x8] sm:$0xff]
    %v215 = vmul.f32 %v61, %v213
    %v216 = vmul.f32 %v62, %v214
    %v217 = vmul.f32 %v63, %v213
    %v218 = vmul.f32 %v64, %v214
    %v219 = vmul.f32 %v65, %v213
    %v220 = vmul.f32 %v66, %v214
    %v221 = vmul.f32 %v67, %v213
    %v222 = vmul.f32 %v68, %v214
    %v223 = vadd.f32 %v204, %v215
    %v224 = vadd.f32 %v205, %v216
    %v225 = vadd.f32 %v206, %v217
    %v226 = vadd.f32 %v207, %v218
    %v227 = vadd.f32 %v208, %v219
    %v228 = vadd.f32 %v209, %v220
    %v229 = vadd.f32 %v210, %v221
    %v230 = vadd.f32 %v211, %v222
    %231 = vrot.lane.b32.xlu0 %v61, 120
    %v232 = vpop.permute.xlu0 %231
    %233 = vrot.lane.b32.xlu0 %v62, 120
    %v234 = vpop.permute.xlu0 %233
    %235 = vrot.lane.b32.xlu0 %v63, 120
    %v236 = vpop.permute.xlu0 %235
    %237 = vrot.lane.b32.xlu0 %v64, 120
    %v238 = vpop.permute.xlu0 %237
    %239 = vrot.lane.b32.xlu0 %v65, 120
    %v240 = vpop.permute.xlu0 %239
    %241 = vrot.lane.b32.xlu0 %v66, 120
    %v242 = vpop.permute.xlu0 %241
    %243 = vrot.lane.b32.xlu0 %v67, 120
    %v244 = vpop.permute.xlu0 %243
    %245 = vrot.lane.b32.xlu0 %v68, 120
    %v246 = vpop.permute.xlu0 %245
    %s247 = scalar_lea.vmem [#allocation5], 80
    %v248 = vld [vmem:[%s247] sm:$0xff]
    %v249 = vld [vmem:[%s247 + $0x8] sm:$0xff]
    %v250 = vmul.f32 %v232, %v248
    %v251 = vmul.f32 %v234, %v249
    %v252 = vmul.f32 %v236, %v248
    %v253 = vmul.f32 %v238, %v249
    %v254 = vmul.f32 %v240, %v248
    %v255 = vmul.f32 %v242, %v249
    %v256 = vmul.f32 %v244, %v248
    %v257 = vmul.f32 %v246, %v249
    %v258 = vadd.f32 %v223, %v250
    %v259 = vadd.f32 %v224, %v251
    %v260 = vadd.f32 %v225, %v252
    %v261 = vadd.f32 %v226, %v253
    %v262 = vadd.f32 %v227, %v254
    %v263 = vadd.f32 %v228, %v255
    %v264 = vadd.f32 %v229, %v256
    %v265 = vadd.f32 %v230, %v257
    %266 = vrot.lane.b32.xlu0 %v97, 8
    %v267 = vpop.permute.xlu0 %266
    %268 = vrot.lane.b32.xlu0 %v101, 8
    %v269 = vpop.permute.xlu0 %268
    %270 = vrot.lane.b32.xlu0 %v98, 8
    %v271 = vpop.permute.xlu0 %270
    %272 = vrot.lane.b32.xlu0 %v102, 8
    %v273 = vpop.permute.xlu0 %272
    %274 = vrot.lane.b32.xlu0 %v99, 8
    %v275 = vpop.permute.xlu0 %274
    %276 = vrot.lane.b32.xlu0 %v103, 8
    %v277 = vpop.permute.xlu0 %276
    %278 = vrot.lane.b32.xlu0 %v100, 8
    %v279 = vpop.permute.xlu0 %278
    %280 = vrot.lane.b32.xlu0 %v104, 8
    %v281 = vpop.permute.xlu0 %280
    %s282 = scalar_lea.vmem [#allocation5], 96
    %v283 = vld [vmem:[%s282] sm:$0xff]
    %v284 = vld [vmem:[%s282 + $0x8] sm:$0xff]
    %v285 = vmul.f32 %v267, %v283
    %v286 = vmul.f32 %v269, %v284
    %v287 = vmul.f32 %v271, %v283
    %v288 = vmul.f32 %v273, %v284
    %v289 = vmul.f32 %v275, %v283
    %v290 = vmul.f32 %v277, %v284
    %v291 = vmul.f32 %v279, %v283
    %v292 = vmul.f32 %v281, %v284
    %s293 = scalar_lea.vmem [#allocation5], 112
    %v294 = vld [vmem:[%s293] sm:$0xff]
    %v295 = vld [vmem:[%s293 + $0x8] sm:$0xff]
    %v296 = vmul.f32 %v97, %v294
    %v297 = vmul.f32 %v101, %v295
    %v298 = vmul.f32 %v98, %v294
    %v299 = vmul.f32 %v102, %v295
    %v300 = vmul.f32 %v99, %v294
    %v301 = vmul.f32 %v103, %v295
    %v302 = vmul.f32 %v100, %v294
    %v303 = vmul.f32 %v104, %v295
    %v304 = vadd.f32 %v285, %v296
    %v305 = vadd.f32 %v286, %v297
    %v306 = vadd.f32 %v287, %v298
    %v307 = vadd.f32 %v288, %v299
    %v308 = vadd.f32 %v289, %v300
    %v309 = vadd.f32 %v290, %v301
    %v310 = vadd.f32 %v291, %v302
    %v311 = vadd.f32 %v292, %v303
    %312 = vrot.lane.b32.xlu0 %v97, 120
    %v313 = vpop.permute.xlu0 %312
    %314 = vrot.lane.b32.xlu0 %v101, 120
    %v315 = vpop.permute.xlu0 %314
    %316 = vrot.lane.b32.xlu0 %v98, 120
    %v317 = vpop.permute.xlu0 %316
    %318 = vrot.lane.b32.xlu0 %v102, 120
    %v319 = vpop.permute.xlu0 %318
    %320 = vrot.lane.b32.xlu0 %v99, 120
    %v321 = vpop.permute.xlu0 %320
    %322 = vrot.lane.b32.xlu0 %v103, 120
    %v323 = vpop.permute.xlu0 %322
    %324 = vrot.lane.b32.xlu0 %v100, 120
    %v325 = vpop.permute.xlu0 %324
    %326 = vrot.lane.b32.xlu0 %v104, 120
    %v327 = vpop.permute.xlu0 %326
    %s328 = scalar_lea.vmem [#allocation5], 128
    %v329 = vld [vmem:[%s328] sm:$0xff]
    %v330 = vld [vmem:[%s328 + $0x8] sm:$0xff]
    %v331 = vmul.f32 %v313, %v329
    %v332 = vmul.f32 %v315, %v330
    %v333 = vmul.f32 %v317, %v329
    %v334 = vmul.f32 %v319, %v330
    %v335 = vmul.f32 %v321, %v329
    %v336 = vmul.f32 %v323, %v330
    %v337 = vmul.f32 %v325, %v329
    %v338 = vmul.f32 %v327, %v330
    %v339 = vadd.f32 %v304, %v331
    %v340 = vadd.f32 %v305, %v332
    %v341 = vadd.f32 %v306, %v333
    %v342 = vadd.f32 %v307, %v334
    %v343 = vadd.f32 %v308, %v335
    %v344 = vadd.f32 %v309, %v336
    %v345 = vadd.f32 %v310, %v337
    %v346 = vadd.f32 %v311, %v338
    %v347 = vadd.f32 %v177, %v258
    %v348 = vadd.f32 %v178, %v259
    %v349 = vadd.f32 %v179, %v260
    %v350 = vadd.f32 %v180, %v261
    %v351 = vadd.f32 %v181, %v262
    %v352 = vadd.f32 %v182, %v263
    %v353 = vadd.f32 %v183, %v264
    %v354 = vadd.f32 %v184, %v265
    %v355 = vadd.f32 %v347, %v339
    %v356 = vadd.f32 %v348, %v340
    %v357 = vadd.f32 %v349, %v341
    %v358 = vadd.f32 %v350, %v342
    %v359 = vadd.f32 %v351, %v343
    %v360 = vadd.f32 %v352, %v344
    %v361 = vadd.f32 %v353, %v345
    %v362 = vadd.f32 %v354, %v346
    %v363 = vld [vmem:[%s2] sm:$0x1]
    %v365 = vlaneseq
    %v366 = vshrl.u32 %v365, 7
    %v367 = vsub.s32 0, %v366
    %v368 = vrot.slane %v363, %v367
    %v370 = vadd.f32 %v355, %v368
    %v371 = vadd.f32 %v356, %v368
    %v372 = vadd.f32 %v357, %v368
    %v373 = vadd.f32 %v358, %v368
    %v374 = vadd.f32 %v359, %v368
    %v375 = vadd.f32 %v360, %v368
    %v376 = vadd.f32 %v361, %v368
    %v377 = vadd.f32 %v362, %v368
    %v378 = vmax.f32 %v370, 0.0
    %v379 = vmax.f32 %v371, 0.0
    %v380 = vmax.f32 %v372, 0.0
    %v381 = vmax.f32 %v373, 0.0
    %v382 = vmax.f32 %v374, 0.0
    %v383 = vmax.f32 %v375, 0.0
    %v384 = vmax.f32 %v376, 0.0
    %v385 = vmax.f32 %v377, 0.0
    %v386 = vadd.f32 %v378, %v379
    %v387 = vrot.slane %v386, 4
    %v388 = vadd.f32 %v386, %v387
    %v389 = vrot.slane %v388, 2
    %v390 = vadd.f32 %v388, %v389
    %v391 = vrot.slane %v390, 1
    %v392 = vadd.f32 %v390, %v391
    %v393 = vadd.f32 %v380, %v381
    %v394 = vrot.slane %v393, 4
    %v395 = vadd.f32 %v393, %v394
    %v396 = vrot.slane %v395, 2
    %v397 = vadd.f32 %v395, %v396
    %v398 = vrot.slane %v397, 1
    %v399 = vadd.f32 %v397, %v398
    %v400 = vadd.f32 %v382, %v383
    %v401 = vrot.slane %v400, 4
    %v402 = vadd.f32 %v400, %v401
    %v403 = vrot.slane %v402, 2
    %v404 = vadd.f32 %v402, %v403
    %v405 = vrot.slane %v404, 1
    %v406 = vadd.f32 %v404, %v405
    %v407 = vadd.f32 %v384, %v385
    %v408 = vrot.slane %v407, 4
    %v409 = vadd.f32 %v407, %v408
    %v410 = vrot.slane %v409, 2
    %v411 = vadd.f32 %v409, %v410
    %v412 = vrot.slane %v411, 1
    %v413 = vadd.f32 %v411, %v412
    %v414 = vld [vmem:[%s3] sm:$0xff]
    %v415 = vld [vmem:[%s3 + $0x8] sm:$0xff]
    %v416 = vld [vmem:[%s3 + $0x10] sm:$0xff]
    %v417 = vld [vmem:[%s3 + $0x18] sm:$0xff]
    %v418 = vld [vmem:[%s3 + $0x20] sm:$0xff]
    %v419 = vld [vmem:[%s3 + $0x28] sm:$0xff]
    %v420 = vld [vmem:[%s3 + $0x30] sm:$0xff]
    %v421 = vld [vmem:[%s3 + $0x38] sm:$0xff]
    %v422 = vld [vmem:[%s3 + $0x40] sm:$0xff]
    %v423 = vld [vmem:[%s3 + $0x48] sm:$0xff]
    %v424 = vld [vmem:[%s3 + $0x50] sm:$0xff]
    %v425 = vld [vmem:[%s3 + $0x58] sm:$0xff]
    %v426 = vld [vmem:[%s3 + $0x60] sm:$0xff]
    %v427 = vld [vmem:[%s3 + $0x68] sm:$0xff]
    %v428 = vld [vmem:[%s3 + $0x70] sm:$0xff]
    %v429 = vld [vmem:[%s3 + $0x78] sm:$0xff]
    %v430 = vld [vmem:[%s4] sm:$0x1]
    %v432 = vlaneseq
    %v433 = vshrl.u32 %v432, 7
    %v434 = vsub.s32 0, %v433
    %v435 = vrot.slane %v430, %v434
    %vm441 = vcmask 1041409
    %v442 = vsel %vm441, %v399, %v392
    %vm443 = vcmask 1042434
    %v444 = vsel %vm443, %v406, %v442
    %vm445 = vcmask 1043459
    %v446 = vsel %vm445, %v413, %v444
    %448 = vmatprep.subr.mxu0 0.0
    %449 = vmatpush1.msra.mxu0 %v414
    %450 = vmatprep.subr.mxu0 0.0
    %451 = vmatpush1.msra.mxu0 %v415
    %452 = vmatprep.subr.mxu0 0.0
    %453 = vmatpush1.msra.mxu0 %v416
    %454 = vmatprep.subr.mxu0 0.0
    %455 = vmatpush1.msra.mxu0 %v417
    %456 = vmatprep.subr.mxu0 0.0
    %457 = vmatpush1.msra.mxu0 %v418
    %458 = vmatprep.subr.mxu0 0.0
    %459 = vmatpush1.msra.mxu0 %v419
    %460 = vmatprep.subr.mxu0 0.0
    %461 = vmatpush1.msra.mxu0 %v420
    %462 = vmatprep.subr.mxu0 0.0
    %463 = vmatpush1.msra.mxu0 %v421
    %464 = vmatprep.subr.mxu0 0.0
    %465 = vmatpush1.msra.mxu0 %v422
    %466 = vmatprep.subr.mxu0 0.0
    %467 = vmatpush1.msra.mxu0 %v423
    %468 = vmatprep.subr.mxu0 0.0
    %469 = vmatpush1.msra.mxu0 %v424
    %470 = vmatprep.subr.mxu0 0.0
    %471 = vmatpush1.msra.mxu0 %v425
    %472 = vmatprep.subr.mxu0 0.0
    %473 = vmatpush1.msra.mxu0 %v426
    %474 = vmatprep.subr.mxu0 0.0
    %475 = vmatpush1.msra.mxu0 %v427
    %476 = vmatprep.subr.mxu0 0.0
    %477 = vmatpush1.msra.mxu0 %v428
    %478 = vmatprep.subr.mxu0 0.0
    %479 = vmatpush1.msra.mxu0 %v429
    %480 = vmatprep.subr.mxu0 0.0
    %481 = vmatpush1.msra.mxu0 0.0
    %482 = vmatprep.subr.mxu0 0.0
    %483 = vmatpush1.msra.mxu0 0.0
    %484 = vmatprep.subr.mxu0 0.0
    %485 = vmatpush1.msra.mxu0 0.0
    %486 = vmatprep.subr.mxu0 0.0
    %487 = vmatpush1.msra.mxu0 0.0
    %488 = vmatprep.subr.mxu0 0.0
    %489 = vmatpush1.msra.mxu0 0.0
    %490 = vmatprep.subr.mxu0 0.0
    %491 = vmatpush1.msra.mxu0 0.0
    %492 = vmatprep.subr.mxu0 0.0
    %493 = vmatpush1.msra.mxu0 0.0
    %494 = vmatprep.subr.mxu0 0.0
    %495 = vmatpush1.msra.mxu0 0.0
    %496 = vmatprep.subr.mxu0 0.0
    %497 = vmatpush1.msra.mxu0 0.0
    %498 = vmatprep.subr.mxu0 0.0
    %499 = vmatpush1.msra.mxu0 0.0
    %500 = vmatprep.subr.mxu0 0.0
    %501 = vmatpush1.msra.mxu0 0.0
    %502 = vmatprep.subr.mxu0 0.0
    %503 = vmatpush1.msra.mxu0 0.0
    %504 = vmatprep.subr.mxu0 0.0
    %505 = vmatpush1.msra.mxu0 0.0
    %506 = vmatprep.subr.mxu0 0.0
    %507 = vmatpush1.msra.mxu0 0.0
    %508 = vmatprep.subr.mxu0 0.0
    %509 = vmatpush1.msra.mxu0 0.0
    %510 = vmatprep.subr.mxu0 0.0
    %511 = vmatpush1.msra.mxu0 0.0
    %512 = vmatprep.mubr.f32.mxu0 0.0
    %513 = vmatmul.mubr.f32.gmra.mrb[0].mxu0 %v446
    %v514 = vpop.f32.mrb[0].mxu0
    %v515 = vadd.f32 %v435, %v514
    %v516 = vpop.f32.mrb[0].mxu0
    %517 = vdwg.mxu0
    %v518 = vmax.f32 %v515, 0.0
    %v519 = vld [vmem:[%s5] sm:$0x3]
    %v520 = vld [vmem:[%s6] sm:$0x1]
    %v522 = vlaneseq
    %v523 = vshrl.u32 %v522, 7
    %v524 = vsub.s32 0, %v523
    %v525 = vrot.slane %v520, %v524
    %vm527 = vcmask 15360
    %v529 = vsel %vm527, %v518, 0
    %vm531 = vcmask 1041408
    %v533 = vsel %vm531, %v519, 0
    %535 = vmatprep.subr.mxu0 0.0
    %536 = vmatpush1.msra.mxu0 %v533
    %537 = vmatprep.subr.mxu0 0.0
    %538 = vmatpush1.msra.mxu0 0.0
    %539 = vmatprep.subr.mxu0 0.0
    %540 = vmatpush1.msra.mxu0 0.0
    %541 = vmatprep.subr.mxu0 0.0
    %542 = vmatpush1.msra.mxu0 0.0
    %543 = vmatprep.subr.mxu0 0.0
    %544 = vmatpush1.msra.mxu0 0.0
    %545 = vmatprep.subr.mxu0 0.0
    %546 = vmatpush1.msra.mxu0 0.0
    %547 = vmatprep.subr.mxu0 0.0
    %548 = vmatpush1.msra.mxu0 0.0
    %549 = vmatprep.subr.mxu0 0.0
    %550 = vmatpush1.msra.mxu0 0.0
    %551 = vmatprep.subr.mxu0 0.0
    %552 = vmatpush1.msra.mxu0 0.0
    %553 = vmatprep.subr.mxu0 0.0
    %554 = vmatpush1.msra.mxu0 0.0
    %555 = vmatprep.subr.mxu0 0.0
    %556 = vmatpush1.msra.mxu0 0.0
    %557 = vmatprep.subr.mxu0 0.0
    %558 = vmatpush1.msra.mxu0 0.0
    %559 = vmatprep.subr.mxu0 0.0
    %560 = vmatpush1.msra.mxu0 0.0
    %561 = vmatprep.subr.mxu0 0.0
    %562 = vmatpush1.msra.mxu0 0.0
    %563 = vmatprep.subr.mxu0 0.0
    %564 = vmatpush1.msra.mxu0 0.0
    %565 = vmatprep.subr.mxu0 0.0
    %566 = vmatpush1.msra.mxu0 0.0
    %567 = vmatprep.subr.mxu0 0.0
    %568 = vmatpush1.msra.mxu0 0.0
    %569 = vmatprep.subr.mxu0 0.0
    %570 = vmatpush1.msra.mxu0 0.0
    %571 = vmatprep.subr.mxu0 0.0
    %572 = vmatpush1.msra.mxu0 0.0
    %573 = vmatprep.subr.mxu0 0.0
    %574 = vmatpush1.msra.mxu0 0.0
    %575 = vmatprep.subr.mxu0 0.0
    %576 = vmatpush1.msra.mxu0 0.0
    %577 = vmatprep.subr.mxu0 0.0
    %578 = vmatpush1.msra.mxu0 0.0
    %579 = vmatprep.subr.mxu0 0.0
    %580 = vmatpush1.msra.mxu0 0.0
    %581 = vmatprep.subr.mxu0 0.0
    %582 = vmatpush1.msra.mxu0 0.0
    %583 = vmatprep.subr.mxu0 0.0
    %584 = vmatpush1.msra.mxu0 0.0
    %585 = vmatprep.subr.mxu0 0.0
    %586 = vmatpush1.msra.mxu0 0.0
    %587 = vmatprep.subr.mxu0 0.0
    %588 = vmatpush1.msra.mxu0 0.0
    %589 = vmatprep.subr.mxu0 0.0
    %590 = vmatpush1.msra.mxu0 0.0
    %591 = vmatprep.subr.mxu0 0.0
    %592 = vmatpush1.msra.mxu0 0.0
    %593 = vmatprep.subr.mxu0 0.0
    %594 = vmatpush1.msra.mxu0 0.0
    %595 = vmatprep.subr.mxu0 0.0
    %596 = vmatpush1.msra.mxu0 0.0
    %597 = vmatprep.subr.mxu0 0.0
    %598 = vmatpush1.msra.mxu0 0.0
    %599 = vmatprep.mubr.f32.mxu0 0.0
    %600 = vmatmul.mubr.f32.gmra.mrb[0].mxu0 %v529
    %v601 = vpop.f32.mrb[0].mxu0
    %v602 = vadd.f32 %v525, %v601
    %v603 = vpop.f32.mrb[0].mxu0
    %604 = vdwg.mxu0
    %v605 = vxor.u32 %v602, 2147483648
    %v606 = vmul.f32 %v605, 1.442695
    %v607 = vpow.pop %v606
    %v608 = vadd.f32 %v607, 1.0
    %v609 = vrcp.pop %v608
    %v610 = vmul.f32 1.0, %v609
    %v613 = vunpack.c.l.s4 1966171168
    %v614 = vunpack.c.0.s8 %v613
    %v615 = vlaneseq
    %v616 = vshrl.u32 %v615, 7
    %v617 = vsub.s32 %v614, %v616
    %v618 = vrot.slane %v610, %v617
    %v619 = vcombine.high %v618, %v618
    %v621 = vunpack.c.l.s4 1966171168
    %v622 = vunpack.c.0.s8 %v621
    %v623 = vlaneseq
    %v624 = vshrl.u32 %v623, 7
    %v625 = vsub.s32 %v622, %v624
    %v626 = vrot.slane %v618, %v625
    %v628 = vunpack.c.l.s4 1966171168
    %v629 = vunpack.c.0.s8 %v628
    %v630 = vlaneseq
    %v631 = vshrl.u32 %v630, 7
    %v632 = vsub.s32 %v629, %v631
    %v633 = vrot.slane %v619, %v632
    %v634 = vcombine.high %v626, %v626
    %v635 = vcombine.high %v633, %v633
    %v636 = vlaneseq
    %v637 = vshrl.u32 %v636, 7
    %v638 = vsub.s32 0, %v637
    %v639 = vrot.slane %v626, %v638
    %v640 = vlaneseq
    %v641 = vshrl.u32 %v640, 7
    %v642 = vsub.s32 0, %v641
    %v643 = vrot.slane %v633, %v642
    %v644 = vlaneseq
    %v645 = vshrl.u32 %v644, 7
    %v646 = vsub.s32 0, %v645
    %v647 = vrot.slane %v634, %v646
    %v648 = vlaneseq
    %v649 = vshrl.u32 %v648, 7
    %v650 = vsub.s32 0, %v649
    %v651 = vrot.slane %v635, %v650
    %v656 = vmul.f32 %v378, %v639
    %v657 = vmul.f32 %v379, %v639
    %v658 = vmul.f32 %v380, %v643
    %v659 = vmul.f32 %v381, %v643
    %v660 = vmul.f32 %v382, %v647
    %v661 = vmul.f32 %v383, %v647
    %v662 = vmul.f32 %v384, %v651
    %v663 = vmul.f32 %v385, %v651
    %v664 = vld [vmem:[%s7] sm:$0xff]
    %v665 = vld [vmem:[%s7 + $0x8] sm:$0xff]
    %v666 = vld [vmem:[%s7 + $0x10] sm:$0xff]
    %v667 = vld [vmem:[%s7 + $0x18] sm:$0xff]
    %v668 = vld [vmem:[%s7 + $0x20] sm:$0xff]
    %v669 = vld [vmem:[%s7 + $0x28] sm:$0xff]
    %v670 = vld [vmem:[%s7 + $0x30] sm:$0xff]
    %v671 = vld [vmem:[%s7 + $0x38] sm:$0xff]
    %v672 = vld [vmem:[%s7 + $0x40] sm:$0xff]
    %v673 = vld [vmem:[%s7 + $0x48] sm:$0xff]
    %v674 = vld [vmem:[%s7 + $0x50] sm:$0xff]
    %v675 = vld [vmem:[%s7 + $0x58] sm:$0xff]
    %v676 = vld [vmem:[%s7 + $0x60] sm:$0xff]
    %v677 = vld [vmem:[%s7 + $0x68] sm:$0xff]
    %v678 = vld [vmem:[%s7 + $0x70] sm:$0xff]
    %v679 = vld [vmem:[%s7 + $0x78] sm:$0xff]
    %v680 = vld [vmem:[%s8] sm:$0x1]
    %v682 = vlaneseq
    %v683 = vshrl.u32 %v682, 7
    %v684 = vsub.s32 0, %v683
    %v685 = vrot.slane %v680, %v684
    %687 = vmatprep.subr.mxu0 0.0
    %688 = vmatpush1.msra.mxu0 %v664
    %689 = vmatprep.subr.mxu0 0.0
    %690 = vmatpush1.msra.mxu0 %v665
    %691 = vmatprep.subr.mxu0 0.0
    %692 = vmatpush1.msra.mxu0 %v666
    %693 = vmatprep.subr.mxu0 0.0
    %694 = vmatpush1.msra.mxu0 %v667
    %695 = vmatprep.subr.mxu0 0.0
    %696 = vmatpush1.msra.mxu0 %v668
    %697 = vmatprep.subr.mxu0 0.0
    %698 = vmatpush1.msra.mxu0 %v669
    %699 = vmatprep.subr.mxu0 0.0
    %700 = vmatpush1.msra.mxu0 %v670
    %701 = vmatprep.subr.mxu0 0.0
    %702 = vmatpush1.msra.mxu0 %v671
    %703 = vmatprep.subr.mxu0 0.0
    %704 = vmatpush1.msra.mxu0 %v672
    %705 = vmatprep.subr.mxu0 0.0
    %706 = vmatpush1.msra.mxu0 %v673
    %707 = vmatprep.subr.mxu0 0.0
    %708 = vmatpush1.msra.mxu0 %v674
    %709 = vmatprep.subr.mxu0 0.0
    %710 = vmatpush1.msra.mxu0 %v675
    %711 = vmatprep.subr.mxu0 0.0
    %712 = vmatpush1.msra.mxu0 %v676
    %713 = vmatprep.subr.mxu0 0.0
    %714 = vmatpush1.msra.mxu0 %v677
    %715 = vmatprep.subr.mxu0 0.0
    %716 = vmatpush1.msra.mxu0 %v678
    %717 = vmatprep.subr.mxu0 0.0
    %718 = vmatpush1.msra.mxu0 %v679
    %719 = vmatprep.subr.mxu0 0.0
    %720 = vmatpush1.msra.mxu0 0.0
    %721 = vmatprep.subr.mxu0 0.0
    %722 = vmatpush1.msra.mxu0 0.0
    %723 = vmatprep.subr.mxu0 0.0
    %724 = vmatpush1.msra.mxu0 0.0
    %725 = vmatprep.subr.mxu0 0.0
    %726 = vmatpush1.msra.mxu0 0.0
    %727 = vmatprep.subr.mxu0 0.0
    %728 = vmatpush1.msra.mxu0 0.0
    %729 = vmatprep.subr.mxu0 0.0
    %730 = vmatpush1.msra.mxu0 0.0
    %731 = vmatprep.subr.mxu0 0.0
    %732 = vmatpush1.msra.mxu0 0.0
    %733 = vmatprep.subr.mxu0 0.0
    %734 = vmatpush1.msra.mxu0 0.0
    %735 = vmatprep.subr.mxu0 0.0
    %736 = vmatpush1.msra.mxu0 0.0
    %737 = vmatprep.subr.mxu0 0.0
    %738 = vmatpush1.msra.mxu0 0.0
    %739 = vmatprep.subr.mxu0 0.0
    %740 = vmatpush1.msra.mxu0 0.0
    %741 = vmatprep.subr.mxu0 0.0
    %742 = vmatpush1.msra.mxu0 0.0
    %743 = vmatprep.subr.mxu0 0.0
    %744 = vmatpush1.msra.mxu0 0.0
    %745 = vmatprep.subr.mxu0 0.0
    %746 = vmatpush1.msra.mxu0 0.0
    %747 = vmatprep.subr.mxu0 0.0
    %748 = vmatpush1.msra.mxu0 0.0
    %749 = vmatprep.subr.mxu0 0.0
    %750 = vmatpush1.msra.mxu0 0.0
    %751 = vmatprep.mubr.f32.mxu0 0.0
    %752 = vmatmul.mubr.f32.gmra.mrb[0].mxu0 %v656
    %v753 = vpop.f32.mrb[0].mxu0
    %v754 = vadd.f32 %v685, %v753
    %v755 = vpop.f32.mrb[0].mxu0
    %756 = vmatprep.mubr.f32.mxu0 0.0
    %757 = vmatmul.mubr.f32.gmra.mrb[0].mxu0 %v657
    %v758 = vpop.f32.mrb[0].mxu0
    %v759 = vadd.f32 %v685, %v758
    %v760 = vpop.f32.mrb[0].mxu0
    %761 = vmatprep.mubr.f32.mxu0 0.0
    %762 = vmatmul.mubr.f32.gmra.mrb[0].mxu0 %v658
    %v763 = vpop.f32.mrb[0].mxu0
    %v764 = vadd.f32 %v685, %v763
    %v765 = vpop.f32.mrb[0].mxu0
    %766 = vmatprep.mubr.f32.mxu0 0.0
    %767 = vmatmul.mubr.f32.gmra.mrb[0].mxu0 %v659
    %v768 = vpop.f32.mrb[0].mxu0
    %v769 = vadd.f32 %v685, %v768
    %v770 = vpop.f32.mrb[0].mxu0
    %771 = vmatprep.mubr.f32.mxu0 0.0
    %772 = vmatmul.mubr.f32.gmra.mrb[0].mxu0 %v660
    %v773 = vpop.f32.mrb[0].mxu0
    %v774 = vadd.f32 %v685, %v773
    %v775 = vpop.f32.mrb[0].mxu0
    %776 = vmatprep.mubr.f32.mxu0 0.0
    %777 = vmatmul.mubr.f32.gmra.mrb[0].mxu0 %v661
    %v778 = vpop.f32.mrb[0].mxu0
    %v779 = vadd.f32 %v685, %v778
    %v780 = vpop.f32.mrb[0].mxu0
    %781 = vmatprep.mubr.f32.mxu0 0.0
    %782 = vmatmul.mubr.f32.gmra.mrb[0].mxu0 %v662
    %v783 = vpop.f32.mrb[0].mxu0
    %v784 = vadd.f32 %v685, %v783
    %v785 = vpop.f32.mrb[0].mxu0
    %786 = vmatprep.mubr.f32.mxu0 0.0
    %787 = vmatmul.mubr.f32.gmra.mrb[0].mxu0 %v663
    %v788 = vpop.f32.mrb[0].mxu0
    %v789 = vadd.f32 %v685, %v788
    %v790 = vpop.f32.mrb[0].mxu0
    %791 = vdwg.mxu0
    %v792 = vadd.f32 %v754, %v61
    %v793 = vadd.f32 %v759, %v62
    %v794 = vadd.f32 %v764, %v63
    %v795 = vadd.f32 %v769, %v64
    %v796 = vadd.f32 %v774, %v65
    %v797 = vadd.f32 %v779, %v66
    %v798 = vadd.f32 %v784, %v67
    %v799 = vadd.f32 %v789, %v68
    %800 = vst [vmem:[#allocation7] sm:$0xff] %v792
    %801 = vst [vmem:[#allocation7 + $0x8] sm:$0xff] %v793
    %802 = vst [vmem:[#allocation7 + $0x10] sm:$0xff] %v794
    %803 = vst [vmem:[#allocation7 + $0x18] sm:$0xff] %v795
    %804 = vst [vmem:[#allocation7 + $0x20] sm:$0xff] %v796
    %805 = vst [vmem:[#allocation7 + $0x28] sm:$0xff] %v797
    %806 = vst [vmem:[#allocation7 + $0x30] sm:$0xff] %v798
    %807 = vst [vmem:[#allocation7 + $0x38] sm:$0xff] %v799
    // Predicated region
    $region46: #{tpu_custom_call.1} parent=1 // pred_check
      _
    $region47: #{tpu_custom_call.1} parent=1 // pred_check_branch
      %809 = sbr.rel (0) target = $region49
    $region48: #{tpu_custom_call.1} parent=1 // pred_region
      %s811 = ssub.s32 1024, 1024
      %812 = vsyncadd [#allocation4], %s811
      %s813 = sshll.u32 [#allocation7], 4
      %s814 = int_to_ptr.vmem [resolvable:$true] %s813
      %819 = dma.vmem_to_hbm [thread:$0]  %s814, 1024, %s9, [#allocation4], 128, 128, 8
    $region49: #{tpu_custom_call.1} parent=1 // pred_fallthru
      _
    // Predicated region
    $region50: #{tpu_custom_call.1} parent=1 // pred_check
      _
    $region51: #{tpu_custom_call.1} parent=1 // pred_check_branch
      %821 = sbr.rel (0) target = $region53
    $region52: #{tpu_custom_call.1} parent=1 // pred_region
      %822 = dma.done [#allocation4], 1024
    $region53: #{tpu_custom_call.1} parent=1 // pred_fallthru
      _
    %823 = vsyncpa [#allocation3], 1
    %824 = vsyncpa [#allocation6], 1
    %825 = vsyncpa [#allocation4], 1

</llo_original>
